<compile_context>
chip_gen: v6e
topology: v6e:2x2x1
jax: 0.10.0
libtpu: 0.0.40
codegen_flags: <defaults>
</compile_context>

<pallas_src>
import jax
import jax.numpy as jnp
from jax.experimental import pallas as pl
from jax.experimental.pallas import tpu as pltpu

_EPS = 1e-5
_LANE = 128
# Slabs smaller than this (bytes) are computed with plain jnp/XLA: fixed
# pallas_call + DMA setup overhead dominates there (raise further on v7x).
_SMALL_SLAB_BYTES = 512 * 1024
# Aim for input blocks of roughly this many bytes (>= ~85% of HBM roofline).
_TARGET_BLOCK_BYTES = 2 << 20


def _batchnorm1d_kernel(x_ref, gamma_ref, beta_ref, o_ref):
    """Training-mode BatchNorm1d on one (N, TILE_C) block resident in VMEM.

    Per-column only: boundary-tile lanes beyond C hold unmasked garbage and
    must never be combined across columns (they are dropped at the store).
    """
    x = x_ref[...].astype(jnp.float32)                        # (N, TILE_C)
    mean = jnp.mean(x, axis=0, keepdims=True)                 # (1, TILE_C)
    xc = x - mean
    var = jnp.mean(xc * xc, axis=0, keepdims=True)            # biased variance
    inv_std = jax.lax.rsqrt(var + _EPS)
    # Fold affine + normalization into one scale/shift: y = x*scale + shift.
    scale = gamma_ref[...].astype(jnp.float32) * inv_std      # (1, TILE_C)
    shift = beta_ref[...].astype(jnp.float32) - mean * scale  # (1, TILE_C)
    o_ref[...] = (x * scale + shift).astype(o_ref.dtype)


def _round_up(v, m):
    return ((v + m - 1) // m) * m


def _vmem_capacity_bytes():
    """Physical VMEM capacity; conservative (v7x-sized) fallback."""
    try:
        cap = getattr(pltpu.get_tpu_info(), "vmem_capacity_bytes", None)
        if cap:
            return int(cap)
    except Exception:
        pass
    return 64 << 20


def _pick_tile_c(n, c, in_itemsize, out_itemsize, vmem_budget):
    """Lane-multiple C tile sized by a byte target under the VMEM budget."""
    per_col_in = n * in_itemsize
    per_col_out = n * out_itemsize
    # Double-buffered input + output blocks dominate the footprint.
    per_col_vmem = 2 * (per_col_in + per_col_out)
    cols_vmem = vmem_budget // max(per_col_vmem, 1)
    cols_target = max(_TARGET_BLOCK_BYTES // max(per_col_in, 1), _LANE)
    tile = (min(cols_vmem, cols_target) // _LANE) * _LANE
    tile = max(tile, _LANE)

    # Keep at least 2 grid steps when C spans >= 2 lane tiles: lets the
    # "parallel" axis split across v7x's two TensorCores and preserves
    # double-buffer overlap on v5e/v6e.
    n_lane_tiles = pl.cdiv(c, _LANE)
    if n_lane_tiles >= 2:
        tile = min(tile, pl.cdiv(n_lane_tiles, 2) * _LANE)

    return min(tile, _round_up(c, _LANE))


def _batchnorm1d_jnp(x2, gamma, beta):
    """Plain-XLA fallback (tiny slabs, or N too large for single-pass VMEM)."""
    x32 = x2.astype(jnp.float32)
    mean = jnp.mean(x32, axis=0, keepdims=True)
    var = jnp.mean(jnp.square(x32 - mean), axis=0, keepdims=True)
    y = (x32 - mean) * jax.lax.rsqrt(var + _EPS) * gamma[None, :] + beta[None, :]
    return y.astype(x2.dtype)


def squeeze_layer_forward(x, gamma, beta, *, force_pallas=False):
    """Forward pass of _SqueezeLayer.

    Args:
      x:     (N, C, 1, 1) array (NCHW, spatial dims already collapsed to 1).
      gamma: (C,) BatchNorm1d weight.
      beta:  (C,) BatchNorm1d bias.
      force_pallas: run the Pallas kernel even for tiny slabs (for testing).

    Returns:
      (N, C) array; batch-normalized iff N > 1 (matching the PyTorch module).
    """
    assert x.ndim == 4 and x.shape[2] == 1 and x.shape[3] == 1, (
        "expected (N, C, 1, 1) input")
    n, c = x.shape[0], x.shape[1]
    x2 = jnp.reshape(x, (n, c))  # squeeze(3), squeeze(2) -> (N, C)

    if n <= 1:
        # PyTorch module skips batch norm entirely when batch size is 1.
        return x2

    out_dtype = x2.dtype
    in_itemsize = jnp.dtype(x2.dtype).itemsize
    out_itemsize = jnp.dtype(out_dtype).itemsize

    if not force_pallas and n * c * in_itemsize < _SMALL_SLAB_BYTES:
        # Kernel/DMA overhead dominates tiny slabs; let XLA fuse it.
        return _batchnorm1d_jnp(x2, gamma, beta)

    vmem_budget = _vmem_capacity_bytes() // 2

    # If even the minimal (N, 128) double-buffered in+out layout cannot fit
    # the budget (very large N), use XLA instead of failing to compile.
    # TODO(synk): N-tiled two-pass accumulation kernel for this regime.
    if 2 * n * _LANE * (in_itemsize + out_itemsize) > vmem_budget:
        return _batchnorm1d_jnp(x2, gamma, beta)

    tile_c = _pick_tile_c(n, c, in_itemsize, out_itemsize, vmem_budget)
    grid_c = pl.cdiv(c, tile_c)
    c_pad = grid_c * tile_c

    # Only the tiny per-feature params are padded; x and the output stay
    # (N, C) and Pallas masks the boundary tile's DMA (garbage lanes feed
    # per-column stats of columns that are never stored).
    gamma2 = jnp.reshape(
        jnp.pad(gamma.astype(jnp.float32), (0, c_pad - c), constant_values=1.0),
        (1, c_pad))
    beta2 = jnp.reshape(
        jnp.pad(beta.astype(jnp.float32), (0, c_pad - c)), (1, c_pad))

    # Scoped-VMEM limit: the real double-buffered footprint plus margin,
    # never clamped below the requirement.
    in_block = n * tile_c * in_itemsize
    out_block = n * tile_c * out_itemsize
    param_block = tile_c * 4
    vmem_limit = max(2 * (in_block + out_block) + 4 * param_block + (2 << 20),
                     16 << 20)

    return pl.pallas_call(
        _batchnorm1d_kernel,
        out_shape=jax.ShapeDtypeStruct((n, c), out_dtype),
        grid=(grid_c,),
        in_specs=[
            pl.BlockSpec((n, tile_c), lambda j: (0, j)),
            pl.BlockSpec((1, tile_c), lambda j: (0, j)),
            pl.BlockSpec((1, tile_c), lambda j: (0, j)),
        ],
        out_specs=pl.BlockSpec((n, tile_c), lambda j: (0, j)),
        compiler_params=pltpu.CompilerParams(
            dimension_semantics=("parallel",),
            vmem_limit_bytes=vmem_limit,
        ),
    )(x2, gamma2, beta2)


if __name__ == "__main__":
    key = jax.random.PRNGKey(0)
    kx, kg, kb = jax.random.split(key, 3)
    N, C = 8, 300  # C not a multiple of 128 -> exercises the masked boundary tile

    x = jax.random.normal(kx, (N, C, 1, 1), dtype=jnp.float32)
    gamma = 1.0 + 0.1 * jax.random.normal(kg, (C,), dtype=jnp.float32)
    beta = 0.1 * jax.random.normal(kb, (C,), dtype=jnp.float32)

    out = jax.block_until_ready(
        squeeze_layer_forward(x, gamma, beta, force_pallas=True))

    # Pure-JAX reference of the same forward semantics.
    x2 = x.reshape(N, C)
    mean = x2.mean(axis=0, keepdims=True)
    var = ((x2 - mean) ** 2).mean(axis=0, keepdims=True)
    ref = (x2 - mean) / jnp.sqrt(var + _EPS) * gamma[None, :] + beta[None, :]
    assert out.shape == (N, C)
    assert jnp.allclose(out, ref, atol=1e-5, rtol=1e-5), (
        float(jnp.max(jnp.abs(out - ref))))

    # Small-slab XLA fallback path agrees with the reference too.
    out_fb = jax.block_until_ready(squeeze_layer_forward(x, gamma, beta))
    assert jnp.allclose(out_fb, ref, atol=1e-5, rtol=1e-5)

    # Batch-size-1 path: pure squeeze pass-through (no batch norm).
    x1 = x[:1]
    out1 = jax.block_until_ready(squeeze_layer_forward(x1, gamma, beta))
    assert out1.shape == (1, C)
    assert jnp.allclose(out1, x1.reshape(1, C))

    print("KERNEL_OK")
</pallas_src>

<mosaic_0001>
module attributes {stable_mosaic.version = 11 : i64} {
  func.func @_batchnorm1d_kernel(%arg0: i32, %arg1: memref<8x256xf32, #tpu.memory_space<vmem>>, %arg2: memref<1x256xf32, #tpu.memory_space<vmem>>, %arg3: memref<1x256xf32, #tpu.memory_space<vmem>>, %arg4: memref<8x256xf32, #tpu.memory_space<vmem>>) attributes {dimension_semantics = [#tpu.dimension_semantics<parallel>], iteration_bounds = array<i64: 2>, scalar_prefetch = 0 : i64, scratch_operands = 0 : i64, tpu.core_type = #tpu.core_type<tc>, window_params = [{transform_indices = @transform_0, window_bounds = array<i64: 8, 256>}, {transform_indices = @transform_1, window_bounds = array<i64: 1, 256>}, {transform_indices = @transform_2, window_bounds = array<i64: 1, 256>}, {transform_indices = @transform_3, window_bounds = array<i64: 8, 256>}]} {
    %c0 = arith.constant 0 : index
    %c0_0 = arith.constant 0 : index
    %0 = vector.load %arg1[%c0, %c0_0] : memref<8x256xf32, #tpu.memory_space<vmem>>, vector<8x256xf32>
    %cst = arith.constant dense<0.000000e+00> : vector<256xf32>
    %1 = vector.multi_reduction <add>, %0, %cst [0] : vector<8x256xf32> to vector<256xf32>
    %2 = vector.shape_cast %1 : vector<256xf32> to vector<1x256xf32>
    %cst_1 = arith.constant 8.000000e+00 : f32
    %3 = vector.broadcast %cst_1 : f32 to vector<1x256xf32>
    %4 = arith.divf %2, %3 : vector<1x256xf32>
    %5 = vector.broadcast %4 : vector<1x256xf32> to vector<8x256xf32>
    %6 = arith.subf %0, %5 : vector<8x256xf32>
    %7 = arith.mulf %6, %6 : vector<8x256xf32>
    %cst_2 = arith.constant dense<0.000000e+00> : vector<256xf32>
    %8 = vector.multi_reduction <add>, %7, %cst_2 [0] : vector<8x256xf32> to vector<256xf32>
    %9 = vector.shape_cast %8 : vector<256xf32> to vector<1x256xf32>
    %cst_3 = arith.constant 8.000000e+00 : f32
    %10 = vector.broadcast %cst_3 : f32 to vector<1x256xf32>
    %11 = arith.divf %9, %10 : vector<1x256xf32>
    %cst_4 = arith.constant 9.99999974E-6 : f32
    %12 = vector.broadcast %cst_4 : f32 to vector<1x256xf32>
    %13 = arith.addf %11, %12 : vector<1x256xf32>
    %14 = math.rsqrt %13 : vector<1x256xf32>
    %c0_5 = arith.constant 0 : index
    %c0_6 = arith.constant 0 : index
    %15 = vector.load %arg2[%c0_5, %c0_6] : memref<1x256xf32, #tpu.memory_space<vmem>>, vector<1x256xf32>
    %16 = arith.mulf %15, %14 : vector<1x256xf32>
    %c0_7 = arith.constant 0 : index
    %c0_8 = arith.constant 0 : index
    %17 = vector.load %arg3[%c0_7, %c0_8] : memref<1x256xf32, #tpu.memory_space<vmem>>, vector<1x256xf32>
    %18 = arith.mulf %4, %16 : vector<1x256xf32>
    %19 = arith.subf %17, %18 : vector<1x256xf32>
    %20 = vector.broadcast %16 : vector<1x256xf32> to vector<8x256xf32>
    %21 = arith.mulf %0, %20 : vector<8x256xf32>
    %22 = vector.broadcast %19 : vector<1x256xf32> to vector<8x256xf32>
    %23 = arith.addf %21, %22 : vector<8x256xf32>
    %c0_9 = arith.constant 0 : index
    %c0_10 = arith.constant 0 : index
    %24 = vector.load %arg4[%c0_9, %c0_10] : memref<8x256xf32, #tpu.memory_space<vmem>>, vector<8x256xf32>
    tpu.vector_store %arg4[%c0_9, %c0_10], %23 {strides = array<i32>} : memref<8x256xf32, #tpu.memory_space<vmem>>, vector<8x256xf32>,
    return
  }
  func.func @transform_0(%arg0: i32) -> (i32, i32) {
    %c0_i32 = arith.constant 0 : i32
    %c0_i32_0 = arith.constant 0 : i32
    return %c0_i32, %arg0 : i32, i32
  }
  func.func @transform_1(%arg0: i32) -> (i32, i32) {
    %c0_i32 = arith.constant 0 : i32
    %c0_i32_0 = arith.constant 0 : i32
    return %c0_i32, %arg0 : i32, i32
  }
  func.func @transform_2(%arg0: i32) -> (i32, i32) {
    %c0_i32 = arith.constant 0 : i32
    %c0_i32_0 = arith.constant 0 : i32
    return %c0_i32, %arg0 : i32, i32
  }
  func.func @transform_3(%arg0: i32) -> (i32, i32) {
    %c0_i32 = arith.constant 0 : i32
    %c0_i32_0 = arith.constant 0 : i32
    return %c0_i32, %arg0 : i32, i32
  }
}

</mosaic_0001>

<llo_original>
// kernel: tpu_custom_call.1
$region0: #{tpu_custom_call.1}
  #allocation0 [shape = 'u32[]', space=smem, size = 0x4, offset = 0x4, fixed_abs, tag = 'smem constant byte address 0x4 - core index']
  #allocation1 [shape = 'u32[144,128]{1,0:T(1,128)}', space=vmem, size = 0x12000, scoped, tag = 'internal scratch']
  %s0 = inlined_call_operand.hbm [shape: f32[8,300], index: 0, kind: input, shape index: {}]
  %s1 = inlined_call_operand.hbm [shape: f32[1,512], index: 1, kind: input, shape index: {}]
  %s2 = inlined_call_operand.hbm [shape: f32[1,512], index: 2, kind: input, shape index: {}]
  %s3 = inlined_call_operand.hbm [shape: f32[8,300], index: 3, kind: output, shape index: {}]
  %s4 = sld [smem:[#allocation0]]
  $region57: #{tpu_custom_call.1} parent=0
    _
  %s6 = ssub.s32 1, %s4
  %s7 = scalar_select 0, %s6, %s4
  $region1: #{tpu_custom_call.1} parent=0
    #allocation2 [shape = 'u8[16384]{0}', space=vmem, size = 0x4000, scoped, tag = 'input window, operand 0']
    #allocation3 [shape = 's32[2]{0}', space=sflag, size = 0x8, scoped, tag = 'scoped memory for tpu_custom_call.1']
    #allocation4 [shape = 's32[2]{0}', space=sflag, size = 0x8, scoped, tag = 'scoped memory for tpu_custom_call.1']
    #allocation5 [shape = 'u8[2048]{0}', space=vmem, size = 0x800, scoped, tag = 'input window, operand 1']
    #allocation6 [shape = 's32[2]{0}', space=sflag, size = 0x8, scoped, tag = 'scoped memory for tpu_custom_call.1']
    #allocation7 [shape = 'u8[2048]{0}', space=vmem, size = 0x800, scoped, tag = 'input window, operand 2']
    #allocation8 [shape = 'u8[16384]{0}', space=vmem, size = 0x4000, scoped, tag = 'output window, operand 0']
    %8 = vsyncpa [#allocation3], 0
    %s9 = scalar_lea.sflag [#allocation3], 1
    %10 = vsyncpa %s9, 0
    %11 = vsyncpa [#allocation6], 0
    %s12 = scalar_lea.sflag [#allocation6], 1
    %13 = vsyncpa %s12, 0
    %14 = vsyncpa [#allocation4], 0
    %s15 = scalar_lea.sflag [#allocation4], 1
    %16 = vsyncpa %s15, 0
    loop: start=0, step=1, limit=4
    $region2: #{tpu_custom_call.1} parent=1 // loop_pre_header
      _
    $region3: #{tpu_custom_call.1} parent=1 // loop_header
      %s18 = sphi 0, %s22
      %p19 = scmp.ge.s32.totalorder %s18, 4
      %s28 = sphi 0, %s30
      %s31 = sphi 0, %s28
      %s32 = sphi 0, %s31
      %s48 = sphi 0, %s32
      %s54 = sphi 0, %s56
      %s57 = sphi 0, %s54
      %s58 = sphi 0, %s57
      %s74 = sphi 0, %s58
      %s80 = sphi 0, %s82
      %s83 = sphi 0, %s80
      %s84 = sphi 0, %s83
      %s100 = sphi 0, %s84
      %s106 = sphi 0, %s108
      %s109 = sphi 0, %s106
      %s110 = sphi 0, %s109
      %s126 = sphi 0, %s110
    $region4: #{tpu_custom_call.1} parent=1 // loop_header_branch
      %21 = sbr.rel (%p19) target = $region8
    $region5: #{tpu_custom_call.1} parent=1 // loop_body
      %s23 = ssub.s32 %s18, 1
      %s24 = ssub.s32 %s18, 2
      %s25 = sadd.s32 %s18, 1
      %s26 = ssub.s32 %s18, %s25
      %p27 = scmp.eq.s32.totalorder %s26, 0
      %s29 = sadd.s32 %s28, 1
      %s30 = scalar_select %p27, %s28, %s29
      %p33 = pneg %p27
      %p34 = scmp.eq.s32.totalorder %s18, 1
      %p35 = por %p33, %p34
      %p36 = scmp.ne.s32.totalorder %s28, %s31
      %p37 = scmp.eq.s32.totalorder %s18, 0
      %p38 = por %p36, %p37
      %p39 = scmp.ne.s32.totalorder %s28, %s31
      %p40 = scmp.eq.s32.totalorder %s23, 1
      %p41 = por %p39, %p40
      %p42 = scmp.ne.s32.totalorder %s31, %s32
      %p43 = scmp.eq.s32.totalorder %s23, 0
      %p44 = por %p42, %p43
      %p45 = scmp.ne.s32.totalorder %s31, %s32
      %p46 = scmp.eq.s32.totalorder %s24, 1
      %p47 = por %p45, %p46
      %p49 = scmp.ne.s32.totalorder %s32, %s48
      %p50 = scmp.eq.s32.totalorder %s24, 0
      %p51 = por %p49, %p50
      %s52 = ssub.s32 %s18, %s25
      %p53 = scmp.eq.s32.totalorder %s52, 0
      %s55 = sadd.s32 %s54, 1
      %s56 = scalar_select %p53, %s54, %s55
      %p59 = pneg %p53
      %p60 = scmp.eq.s32.totalorder %s18, 1
      %p61 = por %p59, %p60
      %p62 = scmp.ne.s32.totalorder %s54, %s57
      %p63 = scmp.eq.s32.totalorder %s18, 0
      %p64 = por %p62, %p63
      %p65 = scmp.ne.s32.totalorder %s54, %s57
      %p66 = scmp.eq.s32.totalorder %s23, 1
      %p67 = por %p65, %p66
      %p68 = scmp.ne.s32.totalorder %s57, %s58
      %p69 = scmp.eq.s32.totalorder %s23, 0
      %p70 = por %p68, %p69
      %p71 = scmp.ne.s32.totalorder %s57, %s58
      %p72 = scmp.eq.s32.totalorder %s24, 1
      %p73 = por %p71, %p72
      %p75 = scmp.ne.s32.totalorder %s58, %s74
      %p76 = scmp.eq.s32.totalorder %s24, 0
      %p77 = por %p75, %p76
      %s78 = ssub.s32 %s18, %s25
      %p79 = scmp.eq.s32.totalorder %s78, 0
      %s81 = sadd.s32 %s80, 1
      %s82 = scalar_select %p79, %s80, %s81
      %p85 = pneg %p79
      %p86 = scmp.eq.s32.totalorder %s18, 1
      %p87 = por %p85, %p86
      %p88 = scmp.ne.s32.totalorder %s80, %s83
      %p89 = scmp.eq.s32.totalorder %s18, 0
      %p90 = por %p88, %p89
      %p91 = scmp.ne.s32.totalorder %s80, %s83
      %p92 = scmp.eq.s32.totalorder %s23, 1
      %p93 = por %p91, %p92
      %p94 = scmp.ne.s32.totalorder %s83, %s84
      %p95 = scmp.eq.s32.totalorder %s23, 0
      %p96 = por %p94, %p95
      %p97 = scmp.ne.s32.totalorder %s83, %s84
      %p98 = scmp.eq.s32.totalorder %s24, 1
      %p99 = por %p97, %p98
      %p101 = scmp.ne.s32.totalorder %s84, %s100
      %p102 = scmp.eq.s32.totalorder %s24, 0
      %p103 = por %p101, %p102
      %s104 = ssub.s32 %s18, %s25
      %p105 = scmp.eq.s32.totalorder %s104, 0
      %s107 = sadd.s32 %s106, 1
      %s108 = scalar_select %p105, %s106, %s107
      %p111 = pneg %p105
      %p112 = scmp.eq.s32.totalorder %s18, 1
      %p113 = por %p111, %p112
      %p114 = scmp.ne.s32.totalorder %s106, %s109
      %p115 = scmp.eq.s32.totalorder %s18, 0
      %p116 = por %p114, %p115
      %p117 = scmp.ne.s32.totalorder %s106, %s109
      %p118 = scmp.eq.s32.totalorder %s23, 1
      %p119 = por %p117, %p118
      %p120 = scmp.ne.s32.totalorder %s109, %s110
      %p121 = scmp.eq.s32.totalorder %s23, 0
      %p122 = por %p120, %p121
      %p123 = scmp.ne.s32.totalorder %s109, %s110
      %p124 = scmp.eq.s32.totalorder %s24, 1
      %p125 = por %p123, %p124
      %p127 = scmp.ne.s32.totalorder %s110, %s126
      %p128 = scmp.eq.s32.totalorder %s24, 0
      %p129 = por %p127, %p128
      %p130 = scmp.le.s32.totalorder 1, %s18
      %p131 = scmp.lt.s32.totalorder %s18, 3
      %p132 = pnand %p130, %p131
      %p133 = pneg %p132
      // Predicated region
      $region9: #{tpu_custom_call.1} parent=5 // pred_check
        _
      $region10: #{tpu_custom_call.1} parent=5 // pred_check_branch
        %135 = sbr.rel (%p132) target = $region12
      $region11: #{tpu_custom_call.1} parent=5 // pred_region
        %s136 = ssub.s32 %s18, 1
      $region12: #{tpu_custom_call.1} parent=5 // pred_fallthru
        _
      %p137 = scmp.lt.s32.totalorder %s18, 2
      // Predicated region
      $region13: #{tpu_custom_call.1} parent=5 // pred_check
        %p138 = pneg %p137
      $region14: #{tpu_custom_call.1} parent=5 // pred_check_branch
        %140 = sbr.rel (%p138) target = $region16
      $region15: #{tpu_custom_call.1} parent=5 // pred_region
        // Predicated region
        $region17: #{tpu_custom_call.1} parent=15 // pred_check
          %p141 = pneg %p38
        $region18: #{tpu_custom_call.1} parent=15 // pred_check_branch
          %143 = sbr.rel (%p141) target = $region20
        $region19: #{tpu_custom_call.1} parent=15 // pred_region
          %s144 = sand.u32 %s28, 1
          %s145 = scalar_lea.sflag [#allocation3], %s144
          %s146 = sand.u32 %s28, 1
          %s147 = smul.addr %s146, 16
          %s148 = scalar_lea.vmem [#allocation2], %s147
          %s149 = smul.u32 2, %s18
          %s150 = ssub.s32 3, %s149
          %p151 = scmp.lt.s32.totalorder %s150, 2
          %s152 = scalar_select %p151, %s150, 2
          %s153 = smul.u32 128, %s152
          %s155 = ssub.s32 256, %s153
          %156 = vsyncadd %s145, %s155
          %p157 = scmp.ne.s32.totalorder 0, %s153
          %s158 = smul.addr %s149, 128
          %s159 = scalar_lea.hbm %s0, %s158
          %s160 = smul.u32 %s152, 8
          %s161 = sshll.u32 %s160, 4
          %s162 = sshll.u32 %s148, 4
          %s163 = int_to_ptr.vmem [resolvable:$true] %s162
          %165 = dma.hbm_to_vmem [thread:$0]  (%p157), %s159, %s161, %s163, %s145
        $region20: #{tpu_custom_call.1} parent=15 // pred_fallthru
          _
        // Predicated region
        $region21: #{tpu_custom_call.1} parent=15 // pred_check
          %p166 = pneg %p64
        $region22: #{tpu_custom_call.1} parent=15 // pred_check_branch
          %168 = sbr.rel (%p166) target = $region24
        $region23: #{tpu_custom_call.1} parent=15 // pred_region
          %s169 = sand.u32 %s18, 1
          %s170 = scalar_lea.sflag [#allocation6], %s169
          %s171 = sand.u32 %s54, 1
          %s172 = smul.addr %s171, 2
          %s173 = scalar_lea.vmem [#allocation5], %s172
          %s174 = smul.u32 2, %s18
          %s176 = ssub.s32 32, 32
          %177 = vsyncadd %s170, %s176
          %s178 = smul.addr %s174, 16
          %s179 = scalar_lea.hbm %s1, %s178
          %s181 = sshll.u32 %s173, 4
          %s182 = int_to_ptr.vmem [resolvable:$true] %s181
          %184 = dma.hbm_to_vmem [thread:$0]  %s179, 32, %s182, %s170
        $region24: #{tpu_custom_call.1} parent=15 // pred_fallthru
          _
        // Predicated region
        $region25: #{tpu_custom_call.1} parent=15 // pred_check
          %p185 = pneg %p90
        $region26: #{tpu_custom_call.1} parent=15 // pred_check_branch
          %187 = sbr.rel (%p185) target = $region28
        $region27: #{tpu_custom_call.1} parent=15 // pred_region
          %s188 = sand.u32 %s18, 1
          %s189 = scalar_lea.sflag [#allocation6], %s188
          %s190 = sand.u32 %s80, 1
          %s191 = smul.addr %s190, 2
          %s192 = scalar_lea.vmem [#allocation7], %s191
          %s193 = smul.u32 2, %s18
          %s195 = ssub.s32 32, 32
          %196 = vsyncadd %s189, %s195
          %s197 = smul.addr %s193, 16
          %s198 = scalar_lea.hbm %s2, %s197
          %s200 = sshll.u32 %s192, 4
          %s201 = int_to_ptr.vmem [resolvable:$true] %s200
          %203 = dma.hbm_to_vmem [thread:$0]  %s198, 32, %s201, %s189
        $region28: #{tpu_custom_call.1} parent=15 // pred_fallthru
          _
      $region16: #{tpu_custom_call.1} parent=5 // pred_fallthru
        _
      %p204 = scmp.le.s32.totalorder 1, %s18
      %p205 = scmp.lt.s32.totalorder %s18, 3
      %p206 = pnand %p204, %p205
      %p207 = pneg %p206
      // Predicated region
      $region29: #{tpu_custom_call.1} parent=5 // pred_check
        _
      $region30: #{tpu_custom_call.1} parent=5 // pred_check_branch
        %209 = sbr.rel (%p206) target = $region32
      $region31: #{tpu_custom_call.1} parent=5 // pred_region
        %s210 = ssub.s32 %s18, 1
        %s211 = sand.u32 %s31, 1
        %s212 = scalar_lea.sflag [#allocation3], %s211
        %s213 = sand.u32 %s31, 1
        %s214 = smul.addr %s213, 16
        %s215 = scalar_lea.vmem [#allocation2], %s214
        // Predicated region
        $region33: #{tpu_custom_call.1} parent=31 // pred_check
          %p216 = pneg %p44
        $region34: #{tpu_custom_call.1} parent=31 // pred_check_branch
          %218 = sbr.rel (%p216) target = $region36
        $region35: #{tpu_custom_call.1} parent=31 // pred_region
          %219 = dma.done %s212, 256
        $region36: #{tpu_custom_call.1} parent=31 // pred_fallthru
          _
        %s220 = sand.u32 %s23, 1
        %s221 = scalar_lea.sflag [#allocation6], %s220
        %s222 = sand.u32 %s57, 1
        %s223 = smul.addr %s222, 2
        %s224 = scalar_lea.vmem [#allocation5], %s223
        // Predicated region
        $region37: #{tpu_custom_call.1} parent=31 // pred_check
          %p225 = pneg %p70
        $region38: #{tpu_custom_call.1} parent=31 // pred_check_branch
          %227 = sbr.rel (%p225) target = $region40
        $region39: #{tpu_custom_call.1} parent=31 // pred_region
          %228 = dma.done %s221, 32
        $region40: #{tpu_custom_call.1} parent=31 // pred_fallthru
          _
        %s229 = sand.u32 %s23, 1
        %s230 = scalar_lea.sflag [#allocation6], %s229
        %s231 = sand.u32 %s83, 1
        %s232 = smul.addr %s231, 2
        %s233 = scalar_lea.vmem [#allocation7], %s232
        // Predicated region
        $region41: #{tpu_custom_call.1} parent=31 // pred_check
          %p234 = pneg %p96
        $region42: #{tpu_custom_call.1} parent=31 // pred_check_branch
          %236 = sbr.rel (%p234) target = $region44
        $region43: #{tpu_custom_call.1} parent=31 // pred_region
          %237 = dma.done %s230, 32
        $region44: #{tpu_custom_call.1} parent=31 // pred_fallthru
          _
        %s238 = sand.u32 %s31, 1
        %s239 = scalar_lea.sflag [#allocation3], %s238
        %s240 = sand.u32 %s31, 1
        %s241 = smul.addr %s240, 16
        %s242 = scalar_lea.vmem [#allocation2], %s241
        %p243 = pneg %p44
        %p244 = pneg %p41
        %s245 = sand.u32 %s23, 1
        %s246 = scalar_lea.sflag [#allocation6], %s245
        %s247 = sand.u32 %s57, 1
        %s248 = smul.addr %s247, 2
        %s249 = scalar_lea.vmem [#allocation5], %s248
        %p250 = pneg %p70
        %p251 = pneg %p67
        %s252 = sand.u32 %s23, 1
        %s253 = scalar_lea.sflag [#allocation6], %s252
        %s254 = sand.u32 %s83, 1
        %s255 = smul.addr %s254, 2
        %s256 = scalar_lea.vmem [#allocation7], %s255
        %p257 = pneg %p96
        %p258 = pneg %p93
        %p259 = pneg %p122
        %p260 = pneg %p119
        %s261 = sand.u32 %s109, 1
        %s262 = scalar_lea.sflag [#allocation4], %s261
        %s263 = sand.u32 %s109, 1
        %s264 = smul.addr %s263, 16
        %s265 = scalar_lea.vmem [#allocation8], %s264
        %s266 = smul.u32 2, %s23
        %s267 = ssub.s32 3, %s266
        %p268 = scmp.lt.s32.totalorder %s267, 2
        %s269 = scalar_select %p268, %s267, 2
        %s270 = smul.u32 128, %s269
        %s271 = smul.u32 2, %s23
        %s272 = smul.u32 2, %s23
        %s273 = smul.u32 2, %s23
        %s274 = ssub.s32 3, %s273
        %p275 = scmp.lt.s32.totalorder %s274, 2
        %s276 = scalar_select %p275, %s274, 2
        %s277 = smul.u32 128, %s276
        %v278 = vld [vmem:[%s215] sm:$0xff]
        %v279 = vld [vmem:[%s215 + $0x8] sm:$0xff]
        %v280 = vrot.slane %v278, 4
        %v281 = vadd.f32 %v278, %v280
        %v282 = vrot.slane %v281, 2
        %v283 = vadd.f32 %v281, %v282
        %v284 = vrot.slane %v283, 1
        %v285 = vadd.f32 %v283, %v284
        %v286 = vrot.slane %v279, 4
        %v287 = vadd.f32 %v279, %v286
        %v288 = vrot.slane %v287, 2
        %v289 = vadd.f32 %v287, %v288
        %v290 = vrot.slane %v289, 1
        %v291 = vadd.f32 %v289, %v290
        %v292 = vrcp.pop 8.0
        %v293 = vmul.f32 %v285, %v292
        %v294 = vmul.f32 %v291, %v292
        %v295 = vsub.f32 %v278, %v293
        %v296 = vsub.f32 %v279, %v294
        %v297 = vmul.f32 %v295, %v295
        %v298 = vmul.f32 %v296, %v296
        %v299 = vrot.slane %v297, 4
        %v300 = vadd.f32 %v297, %v299
        %v301 = vrot.slane %v300, 2
        %v302 = vadd.f32 %v300, %v301
        %v303 = vrot.slane %v302, 1
        %v304 = vadd.f32 %v302, %v303
        %v305 = vrot.slane %v298, 4
        %v306 = vadd.f32 %v298, %v305
        %v307 = vrot.slane %v306, 2
        %v308 = vadd.f32 %v306, %v307
        %v309 = vrot.slane %v308, 1
        %v310 = vadd.f32 %v308, %v309
        %v311 = vmul.f32 %v304, %v292
        %v312 = vmul.f32 %v310, %v292
        %v313 = vadd.f32 %v311, 1e-05
        %v314 = vadd.f32 %v312, 1e-05
        %v315 = vrsqrt.pop %v313
        %v316 = vrsqrt.pop %v314
        %v317 = vld [vmem:[%s224] sm:$0x3]
        %v320 = vcombine.low %v315, %v316
        %v322 = vunpack.c.l.s4 1966171168
        %v323 = vunpack.c.0.s8 %v322
        %v324 = vlaneseq
        %v325 = vshrl.u32 %v324, 7
        %v326 = vsub.s32 %v323, %v325
        %v327 = vrot.slane %v320, %v326
        %v329 = vunpack.c.l.s4 1966171168
        %v330 = vunpack.c.0.s8 %v329
        %v331 = vlaneseq
        %v332 = vshrl.u32 %v331, 7
        %v333 = vsub.s32 %v330, %v332
        %v334 = vrot.slane %v327, %v333
        %v336 = vmul.f32 %v317, %v334
        %v337 = vld [vmem:[%s233] sm:$0x3]
        %v339 = vlaneseq
        %v340 = vshrl.u32 %v339, 7
        %v341 = vsub.s32 0, %v340
        %v342 = vrot.slane %v336, %v341
        %v343 = vlaneseq
        %v344 = vshrl.u32 %v343, 7
        %v345 = vsub.s32 1, %v344
        %v346 = vrot.slane %v336, %v345
        %v349 = vmul.f32 %v293, %v342
        %v350 = vmul.f32 %v294, %v346
        %v353 = vcombine.low %v349, %v350
        %v355 = vunpack.c.l.s4 1966171168
        %v356 = vunpack.c.0.s8 %v355
        %v357 = vlaneseq
        %v358 = vshrl.u32 %v357, 7
        %v359 = vsub.s32 %v356, %v358
        %v360 = vrot.slane %v353, %v359
        %v362 = vunpack.c.l.s4 1966171168
        %v363 = vunpack.c.0.s8 %v362
        %v364 = vlaneseq
        %v365 = vshrl.u32 %v364, 7
        %v366 = vsub.s32 %v363, %v365
        %v367 = vrot.slane %v360, %v366
        %v369 = vsub.f32 %v337, %v367
        %v370 = vmul.f32 %v278, %v342
        %v371 = vmul.f32 %v279, %v346
        %v373 = vlaneseq
        %v374 = vshrl.u32 %v373, 7
        %v375 = vsub.s32 0, %v374
        %v376 = vrot.slane %v369, %v375
        %v377 = vlaneseq
        %v378 = vshrl.u32 %v377, 7
        %v379 = vsub.s32 1, %v378
        %v380 = vrot.slane %v369, %v379
        %v383 = vadd.f32 %v370, %v376
        %v384 = vadd.f32 %v371, %v380
        %385 = vst [vmem:[%s265] sm:$0xff] %v383
        %386 = vst [vmem:[%s265 + $0x8] sm:$0xff] %v384
        %s387 = sand.u32 %s109, 1
        %s388 = scalar_lea.sflag [#allocation4], %s387
        %s389 = sand.u32 %s109, 1
        %s390 = smul.addr %s389, 16
        %s391 = scalar_lea.vmem [#allocation8], %s390
        // Predicated region
        $region45: #{tpu_custom_call.1} parent=31 // pred_check
          %p392 = pneg %p119
        $region46: #{tpu_custom_call.1} parent=31 // pred_check_branch
          %394 = sbr.rel (%p392) target = $region48
        $region47: #{tpu_custom_call.1} parent=31 // pred_region
          %s395 = smul.u32 2, %s23
          %s396 = ssub.s32 3, %s395
          %p397 = scmp.lt.s32.totalorder %s396, 2
          %s398 = scalar_select %p397, %s396, 2
          %s399 = smul.u32 128, %s398
          %s401 = ssub.s32 256, %s399
          %402 = vsyncadd %s388, %s401
          %p403 = scmp.ne.s32.totalorder 0, %s399
          %s404 = smul.addr %s395, 128
          %s405 = scalar_lea.hbm %s3, %s404
          %s406 = smul.u32 %s398, 8
          %s407 = sshll.u32 %s406, 4
          %s408 = sshll.u32 %s391, 4
          %s409 = int_to_ptr.vmem [resolvable:$true] %s408
          %411 = dma.vmem_to_hbm [thread:$0]  (%p403), %s409, %s407, %s405, %s388
        $region48: #{tpu_custom_call.1} parent=31 // pred_fallthru
          _
      $region32: #{tpu_custom_call.1} parent=5 // pred_fallthru
        _
      %p412 = scmp.le.s32.totalorder 2, %s18
      // Predicated region
      $region49: #{tpu_custom_call.1} parent=5 // pred_check
        %p413 = pneg %p412
      $region50: #{tpu_custom_call.1} parent=5 // pred_check_branch
        %415 = sbr.rel (%p413) target = $region52
      $region51: #{tpu_custom_call.1} parent=5 // pred_region
        %s416 = ssub.s32 %s18, 2
        // Predicated region
        $region53: #{tpu_custom_call.1} parent=51 // pred_check
          %p417 = pneg %p125
        $region54: #{tpu_custom_call.1} parent=51 // pred_check_branch
          %419 = sbr.rel (%p417) target = $region56
        $region55: #{tpu_custom_call.1} parent=51 // pred_region
          %s420 = sand.u32 %s110, 1
          %s421 = scalar_lea.sflag [#allocation4], %s420
          %s422 = sand.u32 %s110, 1
          %s423 = smul.addr %s422, 16
          %s424 = scalar_lea.vmem [#allocation8], %s423
          %425 = dma.done %s421, 256
        $region56: #{tpu_custom_call.1} parent=51 // pred_fallthru
          _
      $region52: #{tpu_custom_call.1} parent=5 // pred_fallthru
        _
    $region6: #{tpu_custom_call.1} parent=1 // loop_footer
      %s22 = sadd.s32 1, %s18
    $region7: #{tpu_custom_call.1} parent=1 // loop_footer_branch
      %17 = sbr.rel target = $region3
    $region8: #{tpu_custom_call.1} parent=1 // loop_exit
      _
    %426 = vsyncpa [#allocation3], 1
    %s427 = scalar_lea.sflag [#allocation3], 1
    %428 = vsyncpa %s427, 1
    %429 = vsyncpa [#allocation6], 1
    %s430 = scalar_lea.sflag [#allocation6], 1
    %431 = vsyncpa %s430, 1
    %432 = vsyncpa [#allocation4], 1
    %s433 = scalar_lea.sflag [#allocation4], 1
    %434 = vsyncpa %s433, 1

</llo_original>
